<compile_context>
chip_gen: v6e
topology: v6e:2x2x1
jax: 0.10.0
libtpu: 0.0.40
codegen_flags: <defaults>
</compile_context>

<pallas_src>
import jax
import jax.numpy as jnp
from jax.experimental import pallas as pl
from jax.experimental.pallas import tpu as pltpu


def _concat_squash_kernel(ctx_ref, x_ref, wl_ref, bl_ref, wgb_ref, bgb_ref, o_ref):
    # Shapes inside the kernel (per grid step):
    #   ctx_ref : (B, dim_ctx)          resident across the whole grid
    #   x_ref   : (tN, dim_in)          per-(batch, N-tile) block
    #   wl_ref  : (dim_in, dim_out)     resident
    #   bl_ref  : (1, dim_out)          resident, f32
    #   wgb_ref : (dim_ctx, 2*dim_out)  resident, fused [W_gate | W_hyper_bias]
    #   bgb_ref : (1, 2*dim_out)        resident, f32, fused [b_gate | 0]
    #   o_ref   : (tN, dim_out)
    b = pl.program_id(0)
    dim_out = o_ref.shape[-1]

    # Fused hyper projections: one (1, dim_ctx) x (dim_ctx, 2*dim_out) MXU push.
    ctx_row = ctx_ref[pl.ds(b, 1), :]                                # (1, dim_ctx)
    gb = jnp.dot(ctx_row, wgb_ref[...],
                 preferred_element_type=jnp.float32) + bgb_ref[...]  # (1, 2*dim_out)
    gate = jax.nn.sigmoid(gb[:, :dim_out])                           # (1, dim_out)
    bias = gb[:, dim_out:]                                           # (1, dim_out)

    # Main linear on the point slab: (tN, dim_in) @ (dim_in, dim_out) + b, f32 acc.
    h = jnp.dot(x_ref[...], wl_ref[...],
                preferred_element_type=jnp.float32) + bl_ref[...]    # (tN, dim_out)

    # Broadcast gate/bias over the tN point rows; single cast on store.
    o_ref[...] = (h * gate + bias).astype(o_ref.dtype)


def _pick_tile_n(N, dim_in, dim_out, itemsize, max_tile_n, budget_bytes=8 * 2**20):
    """Largest N-tile (multiple of 16 sublanes) whose double-buffered x/out
    tiles fit a conservative VMEM budget."""
    per_row = 2 * (dim_in + dim_out) * max(itemsize, 4)  # 2 bufs each for x and out
    t = budget_bytes // max(per_row, 1)
    t = int(min(t, max_tile_n, N))
    if t >= N:
        return N                       # single tile: block equals full dim, no alignment need
    return max(16, (t // 16) * 16)     # multiple of 16 works for f32 (8) and bf16 (16)


def concat_squash_linear(ctx, x, params, *, compute_dtype=None, max_tile_n=1024):
    """ctx: (B, 1, dim_ctx), x: (B, N, dim_in) -> (B, N, dim_out)."""
    B, N, dim_in = x.shape
    Bc, one, dim_ctx = ctx.shape
    assert Bc == B and one == 1
    out_dtype = x.dtype

    # Pre-transpose PyTorch (out, in) weights to (in, out); fuse the two hyper
    # projections into one weight/bias pair; keep biases in f32 for the epilogue.
    wl = params["layer_w"].T                                        # (dim_in, dim_out)
    bl = params["layer_b"][None, :].astype(jnp.float32)             # (1, dim_out)
    wg = params["gate_w"].T                                         # (dim_ctx, dim_out)
    wb = params["hbias_w"].T                                        # (dim_ctx, dim_out)
    bg = params["gate_b"]                                           # (dim_out,)
    dim_out = wl.shape[1]

    wgb = jnp.concatenate([wg, wb], axis=1)                         # (dim_ctx, 2*dim_out)
    bgb = jnp.concatenate([bg, jnp.zeros_like(bg)])[None, :].astype(jnp.float32)

    # Optional reduced-precision matmul operands (bf16 recommended on v6e/v7x).
    if compute_dtype is not None:
        x = x.astype(compute_dtype)
        ctx = ctx.astype(compute_dtype)
        wl = wl.astype(compute_dtype)
        wgb = wgb.astype(compute_dtype)

    itemsize = jnp.dtype(x.dtype).itemsize
    tN = _pick_tile_n(N, dim_in, dim_out, itemsize, max_tile_n)
    num_n_tiles = pl.cdiv(N, tN)
    n_pad = num_n_tiles * tN
    if n_pad != N:
        x = jnp.pad(x, ((0, 0), (0, n_pad - N), (0, 0)))

    # Rough per-core VMEM need: double-buffered tiles + resident weights + ctx.
    est_bytes = (
        max(itemsize, 4) * (2 * tN * (dim_in + dim_out)
                            + 2 * (dim_in * dim_out + dim_ctx * 2 * dim_out))
        + 4 * 2 * (3 * dim_out + B * dim_ctx)
    )
    # Clamp: >=32 MiB so small shapes never trip the default scoped limit,
    # <=48 MiB so we stay under v7x's 64 MiB physical VMEM with headroom.
    vmem_limit = int(min(max(2 * est_bytes, 32 * 2**20), 48 * 2**20))

    full2 = lambda b, j: (0, 0)        # resident weights: same full block every step
    full3 = lambda b, j: (0, 0, 0)     # resident ctx

    out = pl.pallas_call(
        _concat_squash_kernel,
        out_shape=jax.ShapeDtypeStruct((B, n_pad, dim_out), out_dtype),
        grid_spec=pltpu.PrefetchScalarGridSpec(
            num_scalar_prefetch=0,
            grid=(B, num_n_tiles),
            in_specs=[
                pl.BlockSpec((B, pl.Squeezed(), dim_ctx), full3),          # ctx (resident)
                pl.BlockSpec((pl.Squeezed(), tN, dim_in), lambda b, j: (b, j, 0)),
                pl.BlockSpec((dim_in, dim_out), full2),                    # Wl
                pl.BlockSpec((1, dim_out), full2),                         # bl
                pl.BlockSpec((dim_ctx, 2 * dim_out), full2),               # [Wg | Wb]
                pl.BlockSpec((1, 2 * dim_out), full2),                     # [bg | 0]
            ],
            out_specs=pl.BlockSpec((pl.Squeezed(), tN, dim_out), lambda b, j: (b, j, 0)),
        ),
        compiler_params=pltpu.CompilerParams(
            dimension_semantics=("parallel", "parallel"),
            vmem_limit_bytes=vmem_limit,
        ),
    )(ctx, x, wl, bl, wgb, bgb)

    if n_pad != N:
        out = out[:, :N, :]
    return out


def init_params(key, dim_in, dim_out, dim_ctx, dtype=jnp.float32):
    """Deterministic synthetic init mirroring nn.Linear parameter shapes."""
    ks = jax.random.split(key, 5)

    def uniform(k, shape, fan_in):
        bound = 1.0 / jnp.sqrt(fan_in)
        return jax.random.uniform(k, shape, dtype, minval=-bound, maxval=bound)

    return {
        "layer_w": uniform(ks[0], (dim_out, dim_in), dim_in),    # Linear(dim_in, dim_out).weight
        "layer_b": uniform(ks[1], (dim_out,), dim_in),           # Linear(dim_in, dim_out).bias
        "gate_w":  uniform(ks[2], (dim_out, dim_ctx), dim_ctx),  # Linear(dim_ctx, dim_out).weight
        "gate_b":  uniform(ks[3], (dim_out,), dim_ctx),          # Linear(dim_ctx, dim_out).bias
        "hbias_w": uniform(ks[4], (dim_out, dim_ctx), dim_ctx),  # Linear(dim_ctx, dim_out, bias=False).weight
    }


def reference(ctx, x, params):
    """Pure-JAX reference matching the PyTorch forward exactly."""
    gate = jax.nn.sigmoid(ctx @ params["gate_w"].T + params["gate_b"])
    bias = ctx @ params["hbias_w"].T
    return (x @ params["layer_w"].T + params["layer_b"]) * gate + bias


if __name__ == "__main__":
    key = jax.random.PRNGKey(0)
    k_p, k_x, k_c, k_x2, k_c2 = jax.random.split(key, 5)

    B, N = 2, 16          # batch, number of points (module-consistent small shape)
    dim_in, dim_out, dim_ctx = 8, 32, 4

    params = init_params(k_p, dim_in, dim_out, dim_ctx)

    # Small-shape check (single N-tile per batch).
    x = jax.random.normal(k_x, (B, N, dim_in), jnp.float32)
    ctx = jax.random.normal(k_c, (B, 1, dim_ctx), jnp.float32)
    out = jax.block_until_ready(concat_squash_linear(ctx, x, params))
    ref = reference(ctx, x, params)
    assert out.shape == (B, N, dim_out), out.shape
    assert jnp.allclose(out, ref, atol=1e-5, rtol=1e-5), float(jnp.max(jnp.abs(out - ref)))

    # Larger check exercising the N-tiling + padding path (grid = (B, 3)).
    N2 = 600
    x2 = jax.random.normal(k_x2, (B, N2, dim_in), jnp.float32)
    ctx2 = jax.random.normal(k_c2, (B, 1, dim_ctx), jnp.float32)
    out2 = jax.block_until_ready(
        concat_squash_linear(ctx2, x2, params, max_tile_n=256))
    ref2 = reference(ctx2, x2, params)
    assert out2.shape == (B, N2, dim_out), out2.shape
    assert jnp.allclose(out2, ref2, atol=1e-4, rtol=1e-4), float(jnp.max(jnp.abs(out2 - ref2)))

    print("KERNEL_OK")
</pallas_src>

<mosaic_0001>
module attributes {stable_mosaic.version = 11 : i64} {
  func.func @_concat_squash_kernel(%arg0: i32, %arg1: i32, %arg2: memref<2x1x4xf32, #tpu.memory_space<vmem>>, %arg3: memref<1x16x8xf32, #tpu.memory_space<vmem>>, %arg4: memref<8x32xf32, #tpu.memory_space<vmem>>, %arg5: memref<1x32xf32, #tpu.memory_space<vmem>>, %arg6: memref<4x64xf32, #tpu.memory_space<vmem>>, %arg7: memref<1x64xf32, #tpu.memory_space<vmem>>, %arg8: memref<1x16x32xf32, #tpu.memory_space<vmem>>) attributes {dimension_semantics = [#tpu.dimension_semantics<parallel>, #tpu.dimension_semantics<parallel>], iteration_bounds = array<i64: 2, 1>, scalar_prefetch = 0 : i64, scratch_operands = 0 : i64, tpu.core_type = #tpu.core_type<tc>, window_params = [{pipeline_mode = #tpu.pipeline_mode<synchronous>, transform_indices = @transform_0, window_bounds = array<i64: 2, 1, 4>}, {transform_indices = @transform_1, window_bounds = array<i64: 1, 16, 8>}, {pipeline_mode = #tpu.pipeline_mode<synchronous>, transform_indices = @transform_2, window_bounds = array<i64: 8, 32>}, {pipeline_mode = #tpu.pipeline_mode<synchronous>, transform_indices = @transform_3, window_bounds = array<i64: 1, 32>}, {pipeline_mode = #tpu.pipeline_mode<synchronous>, transform_indices = @transform_4, window_bounds = array<i64: 4, 64>}, {pipeline_mode = #tpu.pipeline_mode<synchronous>, transform_indices = @transform_5, window_bounds = array<i64: 1, 64>}, {transform_indices = @transform_6, window_bounds = array<i64: 1, 16, 32>}]} {
    %0 = arith.index_cast %arg0 : i32 to index
    %c0 = arith.constant 0 : index
    %c0_0 = arith.constant 0 : index
    %1 = vector.load %arg2[%0, %c0, %c0_0] : memref<2x1x4xf32, #tpu.memory_space<vmem>>, vector<1x1x4xf32>
    %2 = vector.shape_cast %1 : vector<1x1x4xf32> to vector<1x4xf32>
    %c0_1 = arith.constant 0 : index
    %c0_2 = arith.constant 0 : index
    %3 = vector.load %arg6[%c0_1, %c0_2] : memref<4x64xf32, #tpu.memory_space<vmem>>, vector<4x64xf32>
    %cst = arith.constant dense<0.000000e+00> : vector<1x64xf32>
    %4 = tpu.matmul %2, %3, %cst {dimension_numbers = #tpu.dot_dimension_numbers<[1], [0], [0], [1], [0, 0, 1, 1], [], []>} : vector<1x4xf32>, vector<4x64xf32>, vector<1x64xf32> -> vector<1x64xf32>
    %c0_3 = arith.constant 0 : index
    %c0_4 = arith.constant 0 : index
    %5 = vector.load %arg7[%c0_3, %c0_4] : memref<1x64xf32, #tpu.memory_space<vmem>>, vector<1x64xf32>
    %6 = arith.addf %4, %5 : vector<1x64xf32>
    %7 = vector.extract_strided_slice %6 {offsets = [0, 0], sizes = [1, 32], strides = [1, 1]} : vector<1x64xf32> to vector<1x32xf32>
    %8 = arith.negf %7 : vector<1x32xf32>
    %9 = math.exp %8 : vector<1x32xf32>
    %cst_5 = arith.constant 1.000000e+00 : f32
    %10 = vector.broadcast %cst_5 : f32 to vector<1x32xf32>
    %11 = arith.addf %10, %9 : vector<1x32xf32>
    %12 = arith.divf %10, %11 : vector<1x32xf32>
    %13 = vector.extract_strided_slice %6 {offsets = [0, 32], sizes = [1, 32], strides = [1, 1]} : vector<1x64xf32> to vector<1x32xf32>
    %c0_6 = arith.constant 0 : index
    %c0_7 = arith.constant 0 : index
    %c0_8 = arith.constant 0 : index
    %14 = vector.load %arg3[%c0_6, %c0_7, %c0_8] : memref<1x16x8xf32, #tpu.memory_space<vmem>>, vector<1x16x8xf32>
    %15 = vector.shape_cast %14 : vector<1x16x8xf32> to vector<16x8xf32>
    %c0_9 = arith.constant 0 : index
    %c0_10 = arith.constant 0 : index
    %16 = vector.load %arg4[%c0_9, %c0_10] : memref<8x32xf32, #tpu.memory_space<vmem>>, vector<8x32xf32>
    %cst_11 = arith.constant dense<0.000000e+00> : vector<16x32xf32>
    %17 = tpu.matmul %15, %16, %cst_11 {dimension_numbers = #tpu.dot_dimension_numbers<[1], [0], [0], [1], [0, 0, 1, 1], [], []>} : vector<16x8xf32>, vector<8x32xf32>, vector<16x32xf32> -> vector<16x32xf32>
    %c0_12 = arith.constant 0 : index
    %c0_13 = arith.constant 0 : index
    %18 = vector.load %arg5[%c0_12, %c0_13] : memref<1x32xf32, #tpu.memory_space<vmem>>, vector<1x32xf32>
    %19 = vector.broadcast %18 : vector<1x32xf32> to vector<16x32xf32>
    %20 = arith.addf %17, %19 : vector<16x32xf32>
    %21 = vector.broadcast %12 : vector<1x32xf32> to vector<16x32xf32>
    %22 = arith.mulf %20, %21 : vector<16x32xf32>
    %23 = vector.broadcast %13 : vector<1x32xf32> to vector<16x32xf32>
    %24 = arith.addf %22, %23 : vector<16x32xf32>
    %c0_14 = arith.constant 0 : index
    %c0_15 = arith.constant 0 : index
    %c0_16 = arith.constant 0 : index
    %25 = vector.load %arg8[%c0_14, %c0_15, %c0_16] : memref<1x16x32xf32, #tpu.memory_space<vmem>>, vector<1x16x32xf32>
    %26 = vector.shape_cast %25 : vector<1x16x32xf32> to vector<16x32xf32>
    %27 = vector.shape_cast %24 : vector<16x32xf32> to vector<1x16x32xf32>
    tpu.vector_store %arg8[%c0_14, %c0_15, %c0_16], %27 {strides = array<i32>} : memref<1x16x32xf32, #tpu.memory_space<vmem>>, vector<1x16x32xf32>,
    return
  }
  func.func @transform_0(%arg0: i32, %arg1: i32) -> (i32, i32, i32) {
    %c0_i32 = arith.constant 0 : i32
    %c0_i32_0 = arith.constant 0 : i32
    %c0_i32_1 = arith.constant 0 : i32
    %c0_i32_2 = arith.constant 0 : i32
    return %c0_i32, %c0_i32_0, %c0_i32_1 : i32, i32, i32
  }
  func.func @transform_1(%arg0: i32, %arg1: i32) -> (i32, i32, i32) {
    %c0_i32 = arith.constant 0 : i32
    %c0_i32_0 = arith.constant 0 : i32
    return %arg0, %arg1, %c0_i32 : i32, i32, i32
  }
  func.func @transform_2(%arg0: i32, %arg1: i32) -> (i32, i32) {
    %c0_i32 = arith.constant 0 : i32
    %c0_i32_0 = arith.constant 0 : i32
    %c0_i32_1 = arith.constant 0 : i32
    return %c0_i32, %c0_i32_0 : i32, i32
  }
  func.func @transform_3(%arg0: i32, %arg1: i32) -> (i32, i32) {
    %c0_i32 = arith.constant 0 : i32
    %c0_i32_0 = arith.constant 0 : i32
    %c0_i32_1 = arith.constant 0 : i32
    return %c0_i32, %c0_i32_0 : i32, i32
  }
  func.func @transform_4(%arg0: i32, %arg1: i32) -> (i32, i32) {
    %c0_i32 = arith.constant 0 : i32
    %c0_i32_0 = arith.constant 0 : i32
    %c0_i32_1 = arith.constant 0 : i32
    return %c0_i32, %c0_i32_0 : i32, i32
  }
  func.func @transform_5(%arg0: i32, %arg1: i32) -> (i32, i32) {
    %c0_i32 = arith.constant 0 : i32
    %c0_i32_0 = arith.constant 0 : i32
    %c0_i32_1 = arith.constant 0 : i32
    return %c0_i32, %c0_i32_0 : i32, i32
  }
  func.func @transform_6(%arg0: i32, %arg1: i32) -> (i32, i32, i32) {
    %c0_i32 = arith.constant 0 : i32
    %c0_i32_0 = arith.constant 0 : i32
    return %arg0, %arg1, %c0_i32 : i32, i32, i32
  }
}

</mosaic_0001>

<llo_original>
// kernel: tpu_custom_call.1
$region0: #{tpu_custom_call.1}
  #allocation0 [shape = 'u32[]', space=smem, size = 0x4, offset = 0x4, fixed_abs, tag = 'smem constant byte address 0x4 - core index']
  #allocation1 [shape = 'u32[144,128]{1,0:T(1,128)}', space=vmem, size = 0x12000, scoped, tag = 'internal scratch']
  %s0 = inlined_call_operand.vmem [shape: f32[2,1,4], index: 0, kind: input, shape index: {}]
  %s1 = inlined_call_operand.vmem [shape: f32[2,16,8], index: 1, kind: input, shape index: {}]
  %s2 = inlined_call_operand.vmem [shape: f32[8,32], index: 2, kind: input, shape index: {}]
  %s3 = inlined_call_operand.vmem [shape: f32[1,32], index: 3, kind: input, shape index: {}]
  %s4 = inlined_call_operand.vmem [shape: f32[4,64], index: 4, kind: input, shape index: {}]
  %s5 = inlined_call_operand.vmem [shape: f32[1,64], index: 5, kind: input, shape index: {}]
  %s6 = inlined_call_operand.hbm [shape: f32[2,16,32], index: 6, kind: output, shape index: {}]
  %s7 = sld [smem:[#allocation0]]
  $region57: #{tpu_custom_call.1} parent=0
    _
  %s9 = ssub.s32 1, %s7
  %s10 = scalar_select 0, %s9, %s7
  $region1: #{tpu_custom_call.1} parent=0
    #allocation2 [shape = 'u8[16384]{0}', space=vmem, size = 0x4000, scoped, tag = 'output window, operand 0']
    #allocation3 [shape = 's32[2]{0}', space=sflag, size = 0x8, scoped, tag = 'scoped memory for tpu_custom_call.1']
    %11 = vsyncpa [#allocation3], 0
    %s12 = scalar_lea.sflag [#allocation3], 1
    %13 = vsyncpa %s12, 0
    loop: start=0, step=1, limit=4
    $region2: #{tpu_custom_call.1} parent=1 // loop_pre_header
      _
    $region3: #{tpu_custom_call.1} parent=1 // loop_header
      %s15 = sphi 0, %s19
      %p16 = scmp.ge.s32.totalorder %s15, 4
      %s22 = sphi 0, %s34
      %s23 = sphi 0, %s30
      %s24 = sphi 0, %s22
      %s25 = sphi 0, %s23
      %s26 = sphi 0, %s24
      %s27 = sphi 0, %s25
      %s35 = sphi 0, %s35
      %s37 = sphi 0, %s35
      %s38 = sphi 0, %s37
      %s52 = sphi 0, %s38
      %s60 = sphi 0, %s62
      %s63 = sphi 0, %s60
      %s64 = sphi 0, %s63
      %s80 = sphi 0, %s64
      %s84 = sphi 0, %s84
      %s86 = sphi 0, %s84
      %s87 = sphi 0, %s86
      %s101 = sphi 0, %s87
      %s105 = sphi 0, %s105
      %s107 = sphi 0, %s105
      %s108 = sphi 0, %s107
      %s122 = sphi 0, %s108
      %s126 = sphi 0, %s126
      %s128 = sphi 0, %s126
      %s129 = sphi 0, %s128
      %s143 = sphi 0, %s129
      %s147 = sphi 0, %s147
      %s149 = sphi 0, %s147
      %s150 = sphi 0, %s149
      %s164 = sphi 0, %s150
      %s172 = sphi 0, %s174
      %s175 = sphi 0, %s172
      %s176 = sphi 0, %s175
      %s192 = sphi 0, %s176
    $region4: #{tpu_custom_call.1} parent=1 // loop_header_branch
      %18 = sbr.rel (%p16) target = $region8
    $region5: #{tpu_custom_call.1} parent=1 // loop_body
      %s20 = ssub.s32 %s15, 1
      %s21 = ssub.s32 %s15, 2
      %s28 = sadd.s32 1, %s23
      %p29 = scmp.ge.s32.totalorder %s28, 1
      %s30 = scalar_select %p29, 0, %s28
      %s31 = sadd.s32 1, %s22
      %s32 = scalar_select %p29, %s31, %s22
      %p33 = scmp.ge.s32.totalorder %s32, 2
      %s34 = scalar_select %p33, 0, %s32
      %s36 = sadd.s32 %s35, 1
      %p39 = scmp.eq.s32.totalorder %s15, 1
      %p40 = scmp.ne.s32.totalorder %s35, %s37
      %p41 = scmp.eq.s32.totalorder %s15, 0
      %p42 = por %p40, %p41
      %p43 = scmp.ne.s32.totalorder %s35, %s37
      %p44 = scmp.eq.s32.totalorder %s20, 1
      %p45 = por %p43, %p44
      %p46 = scmp.ne.s32.totalorder %s37, %s38
      %p47 = scmp.eq.s32.totalorder %s20, 0
      %p48 = por %p46, %p47
      %p49 = scmp.ne.s32.totalorder %s37, %s38
      %p50 = scmp.eq.s32.totalorder %s21, 1
      %p51 = por %p49, %p50
      %p53 = scmp.ne.s32.totalorder %s38, %s52
      %p54 = scmp.eq.s32.totalorder %s21, 0
      %p55 = por %p53, %p54
      %s56 = ssub.s32 %s22, %s34
      %s57 = ssub.s32 %s23, %s30
      %s58 = sor.u32 %s56, %s57
      %p59 = scmp.eq.s32.totalorder %s58, 0
      %s61 = sadd.s32 %s60, 1
      %s62 = scalar_select %p59, %s60, %s61
      %p65 = pneg %p59
      %p66 = scmp.eq.s32.totalorder %s15, 1
      %p67 = por %p65, %p66
      %p68 = scmp.ne.s32.totalorder %s60, %s63
      %p69 = scmp.eq.s32.totalorder %s15, 0
      %p70 = por %p68, %p69
      %p71 = scmp.ne.s32.totalorder %s60, %s63
      %p72 = scmp.eq.s32.totalorder %s20, 1
      %p73 = por %p71, %p72
      %p74 = scmp.ne.s32.totalorder %s63, %s64
      %p75 = scmp.eq.s32.totalorder %s20, 0
      %p76 = por %p74, %p75
      %p77 = scmp.ne.s32.totalorder %s63, %s64
      %p78 = scmp.eq.s32.totalorder %s21, 1
      %p79 = por %p77, %p78
      %p81 = scmp.ne.s32.totalorder %s64, %s80
      %p82 = scmp.eq.s32.totalorder %s21, 0
      %p83 = por %p81, %p82
      %s85 = sadd.s32 %s84, 1
      %p88 = scmp.eq.s32.totalorder %s15, 1
      %p89 = scmp.ne.s32.totalorder %s84, %s86
      %p90 = scmp.eq.s32.totalorder %s15, 0
      %p91 = por %p89, %p90
      %p92 = scmp.ne.s32.totalorder %s84, %s86
      %p93 = scmp.eq.s32.totalorder %s20, 1
      %p94 = por %p92, %p93
      %p95 = scmp.ne.s32.totalorder %s86, %s87
      %p96 = scmp.eq.s32.totalorder %s20, 0
      %p97 = por %p95, %p96
      %p98 = scmp.ne.s32.totalorder %s86, %s87
      %p99 = scmp.eq.s32.totalorder %s21, 1
      %p100 = por %p98, %p99
      %p102 = scmp.ne.s32.totalorder %s87, %s101
      %p103 = scmp.eq.s32.totalorder %s21, 0
      %p104 = por %p102, %p103
      %s106 = sadd.s32 %s105, 1
      %p109 = scmp.eq.s32.totalorder %s15, 1
      %p110 = scmp.ne.s32.totalorder %s105, %s107
      %p111 = scmp.eq.s32.totalorder %s15, 0
      %p112 = por %p110, %p111
      %p113 = scmp.ne.s32.totalorder %s105, %s107
      %p114 = scmp.eq.s32.totalorder %s20, 1
      %p115 = por %p113, %p114
      %p116 = scmp.ne.s32.totalorder %s107, %s108
      %p117 = scmp.eq.s32.totalorder %s20, 0
      %p118 = por %p116, %p117
      %p119 = scmp.ne.s32.totalorder %s107, %s108
      %p120 = scmp.eq.s32.totalorder %s21, 1
      %p121 = por %p119, %p120
      %p123 = scmp.ne.s32.totalorder %s108, %s122
      %p124 = scmp.eq.s32.totalorder %s21, 0
      %p125 = por %p123, %p124
      %s127 = sadd.s32 %s126, 1
      %p130 = scmp.eq.s32.totalorder %s15, 1
      %p131 = scmp.ne.s32.totalorder %s126, %s128
      %p132 = scmp.eq.s32.totalorder %s15, 0
      %p133 = por %p131, %p132
      %p134 = scmp.ne.s32.totalorder %s126, %s128
      %p135 = scmp.eq.s32.totalorder %s20, 1
      %p136 = por %p134, %p135
      %p137 = scmp.ne.s32.totalorder %s128, %s129
      %p138 = scmp.eq.s32.totalorder %s20, 0
      %p139 = por %p137, %p138
      %p140 = scmp.ne.s32.totalorder %s128, %s129
      %p141 = scmp.eq.s32.totalorder %s21, 1
      %p142 = por %p140, %p141
      %p144 = scmp.ne.s32.totalorder %s129, %s143
      %p145 = scmp.eq.s32.totalorder %s21, 0
      %p146 = por %p144, %p145
      %s148 = sadd.s32 %s147, 1
      %p151 = scmp.eq.s32.totalorder %s15, 1
      %p152 = scmp.ne.s32.totalorder %s147, %s149
      %p153 = scmp.eq.s32.totalorder %s15, 0
      %p154 = por %p152, %p153
      %p155 = scmp.ne.s32.totalorder %s147, %s149
      %p156 = scmp.eq.s32.totalorder %s20, 1
      %p157 = por %p155, %p156
      %p158 = scmp.ne.s32.totalorder %s149, %s150
      %p159 = scmp.eq.s32.totalorder %s20, 0
      %p160 = por %p158, %p159
      %p161 = scmp.ne.s32.totalorder %s149, %s150
      %p162 = scmp.eq.s32.totalorder %s21, 1
      %p163 = por %p161, %p162
      %p165 = scmp.ne.s32.totalorder %s150, %s164
      %p166 = scmp.eq.s32.totalorder %s21, 0
      %p167 = por %p165, %p166
      %s168 = ssub.s32 %s22, %s34
      %s169 = ssub.s32 %s23, %s30
      %s170 = sor.u32 %s168, %s169
      %p171 = scmp.eq.s32.totalorder %s170, 0
      %s173 = sadd.s32 %s172, 1
      %s174 = scalar_select %p171, %s172, %s173
      %p177 = pneg %p171
      %p178 = scmp.eq.s32.totalorder %s15, 1
      %p179 = por %p177, %p178
      %p180 = scmp.ne.s32.totalorder %s172, %s175
      %p181 = scmp.eq.s32.totalorder %s15, 0
      %p182 = por %p180, %p181
      %p183 = scmp.ne.s32.totalorder %s172, %s175
      %p184 = scmp.eq.s32.totalorder %s20, 1
      %p185 = por %p183, %p184
      %p186 = scmp.ne.s32.totalorder %s175, %s176
      %p187 = scmp.eq.s32.totalorder %s20, 0
      %p188 = por %p186, %p187
      %p189 = scmp.ne.s32.totalorder %s175, %s176
      %p190 = scmp.eq.s32.totalorder %s21, 1
      %p191 = por %p189, %p190
      %p193 = scmp.ne.s32.totalorder %s176, %s192
      %p194 = scmp.eq.s32.totalorder %s21, 0
      %p195 = por %p193, %p194
      %p196 = scmp.le.s32.totalorder 1, %s15
      %p197 = scmp.lt.s32.totalorder %s15, 3
      %p198 = pnand %p196, %p197
      %p199 = pneg %p198
      // Predicated region
      $region9: #{tpu_custom_call.1} parent=5 // pred_check
        _
      $region10: #{tpu_custom_call.1} parent=5 // pred_check_branch
        %201 = sbr.rel (%p198) target = $region12
      $region11: #{tpu_custom_call.1} parent=5 // pred_region
        %s202 = ssub.s32 %s15, 1
        // Predicated region
        $region13: #{tpu_custom_call.1} parent=11 // pred_check
          %p203 = pneg %p48
        $region14: #{tpu_custom_call.1} parent=11 // pred_check_branch
          %205 = sbr.rel (%p203) target = $region16
        $region15: #{tpu_custom_call.1} parent=11 // pred_region
          _
        $region16: #{tpu_custom_call.1} parent=11 // pred_fallthru
          _
        // Predicated region
        $region17: #{tpu_custom_call.1} parent=11 // pred_check
          %p206 = pneg %p97
        $region18: #{tpu_custom_call.1} parent=11 // pred_check_branch
          %208 = sbr.rel (%p206) target = $region20
        $region19: #{tpu_custom_call.1} parent=11 // pred_region
          _
        $region20: #{tpu_custom_call.1} parent=11 // pred_fallthru
          _
        // Predicated region
        $region21: #{tpu_custom_call.1} parent=11 // pred_check
          %p209 = pneg %p118
        $region22: #{tpu_custom_call.1} parent=11 // pred_check_branch
          %211 = sbr.rel (%p209) target = $region24
        $region23: #{tpu_custom_call.1} parent=11 // pred_region
          _
        $region24: #{tpu_custom_call.1} parent=11 // pred_fallthru
          _
        // Predicated region
        $region25: #{tpu_custom_call.1} parent=11 // pred_check
          %p212 = pneg %p139
        $region26: #{tpu_custom_call.1} parent=11 // pred_check_branch
          %214 = sbr.rel (%p212) target = $region28
        $region27: #{tpu_custom_call.1} parent=11 // pred_region
          _
        $region28: #{tpu_custom_call.1} parent=11 // pred_fallthru
          _
        // Predicated region
        $region29: #{tpu_custom_call.1} parent=11 // pred_check
          %p215 = pneg %p160
        $region30: #{tpu_custom_call.1} parent=11 // pred_check_branch
          %217 = sbr.rel (%p215) target = $region32
        $region31: #{tpu_custom_call.1} parent=11 // pred_region
          _
        $region32: #{tpu_custom_call.1} parent=11 // pred_fallthru
          _
      $region12: #{tpu_custom_call.1} parent=5 // pred_fallthru
        _
      %p218 = scmp.lt.s32.totalorder %s15, 2
      // Predicated region
      $region33: #{tpu_custom_call.1} parent=5 // pred_check
        %p219 = pneg %p218
      $region34: #{tpu_custom_call.1} parent=5 // pred_check_branch
        %221 = sbr.rel (%p219) target = $region36
      $region35: #{tpu_custom_call.1} parent=5 // pred_region
        // Predicated region
        $region37: #{tpu_custom_call.1} parent=35 // pred_check
          %p222 = pneg %p70
        $region38: #{tpu_custom_call.1} parent=35 // pred_check_branch
          %224 = sbr.rel (%p222) target = $region40
        $region39: #{tpu_custom_call.1} parent=35 // pred_region
          %s225 = smul.u32 2, %s23
          %p226 = scmp.lt.s32.totalorder %s22, 1
          %s227 = scalar_select %p226, %s22, 1
          %p228 = scmp.lt.s32.totalorder %s225, 1
          %s229 = scalar_select %p228, %s225, 1
          %s230 = smul.addr %s227, 2
          %s231 = sadd.s32 %s229, %s230
          %s232 = smul.addr %s231, 8
          %s233 = scalar_lea.vmem %s1, %s232
          %s234 = smul.u32 2, %s23
        $region40: #{tpu_custom_call.1} parent=35 // pred_fallthru
          _
      $region36: #{tpu_custom_call.1} parent=5 // pred_fallthru
        _
      %p235 = scmp.le.s32.totalorder 1, %s15
      %p236 = scmp.lt.s32.totalorder %s15, 3
      %p237 = pnand %p235, %p236
      %p238 = pneg %p237
      // Predicated region
      $region41: #{tpu_custom_call.1} parent=5 // pred_check
        _
      $region42: #{tpu_custom_call.1} parent=5 // pred_check_branch
        %240 = sbr.rel (%p237) target = $region44
      $region43: #{tpu_custom_call.1} parent=5 // pred_region
        %s241 = ssub.s32 %s15, 1
        %p242 = pneg %p48
        %p243 = pneg %p45
        %s244 = smul.u32 2, %s25
        %p245 = scmp.lt.s32.totalorder %s24, 1
        %s246 = scalar_select %p245, %s24, 1
        %p247 = scmp.lt.s32.totalorder %s244, 1
        %s248 = scalar_select %p247, %s244, 1
        %s249 = smul.addr %s246, 2
        %s250 = sadd.s32 %s248, %s249
        %s251 = smul.addr %s250, 8
        %s252 = scalar_lea.vmem %s1, %s251
        %p253 = pneg %p76
        %p254 = pneg %p73
        %p255 = pneg %p97
        %p256 = pneg %p94
        %p257 = pneg %p118
        %p258 = pneg %p115
        %p259 = pneg %p139
        %p260 = pneg %p136
        %p261 = pneg %p160
        %p262 = pneg %p157
        %p263 = pneg %p188
        %p264 = pneg %p185
        %s265 = sand.u32 %s175, 1
        %s266 = scalar_lea.sflag [#allocation3], %s265
        %s267 = sand.u32 %s175, 1
        %s268 = smul.addr %s267, 16
        %s269 = scalar_lea.vmem [#allocation2], %s268
        %s270 = smul.u32 2, %s25
        %p271 = scmp.lt.s32.totalorder %s24, 1
        %s272 = scalar_select %p271, %s24, 1
        %p273 = scmp.lt.s32.totalorder %s270, 1
        %s274 = scalar_select %p273, %s270, 1
        %s275 = smul.addr %s272, 2
        %s276 = sadd.s32 %s274, %s275
        %s277 = smul.addr %s276, 8
        %s278 = scalar_lea.vmem %s1, %s277
        %s279 = smul.u32 2, %s25
        %s280 = smul.u32 2, %s25
        %s281 = scalar_lea.vmem %s0, %s24
        %v282 = vld [vmem:[%s281] sm:$0x1]
        %v283 = vld [vmem:[%s4] sm:$0xf]
        %v284 = vld [vmem:[%s5] sm:$0x1]
        %vm285 = vcmask 31744
        %v287 = vsel %vm285, %v282, 0
        %vm289 = vcmask 1043456
        %v291 = vsel %vm289, %v283, 0
        %293 = vmatprep.subr.mxu0 0.0
        %294 = vmatpush1.msra.mxu0 0.0
        %295 = vmatprep.subr.mxu0 0.0
        %296 = vmatpush1.msra.mxu0 0.0
        %297 = vmatprep.subr.mxu0 0.0
        %298 = vmatpush1.msra.mxu0 0.0
        %299 = vmatprep.subr.mxu0 0.0
        %300 = vmatpush1.msra.mxu0 0.0
        %301 = vmatprep.subr.mxu0 0.0
        %302 = vmatpush1.msra.mxu0 0.0
        %303 = vmatprep.subr.mxu0 0.0
        %304 = vmatpush1.msra.mxu0 0.0
        %305 = vmatprep.subr.mxu0 0.0
        %306 = vmatpush1.msra.mxu0 0.0
        %307 = vmatprep.subr.mxu0 0.0
        %308 = vmatpush1.msra.mxu0 0.0
        %309 = vmatprep.subr.mxu0 0.0
        %310 = vmatpush1.msra.mxu0 0.0
        %311 = vmatprep.subr.mxu0 0.0
        %312 = vmatpush1.msra.mxu0 0.0
        %313 = vmatprep.subr.mxu0 0.0
        %314 = vmatpush1.msra.mxu0 0.0
        %315 = vmatprep.subr.mxu0 0.0
        %316 = vmatpush1.msra.mxu0 0.0
        %317 = vmatprep.subr.mxu0 0.0
        %318 = vmatpush1.msra.mxu0 0.0
        %319 = vmatprep.subr.mxu0 0.0
        %320 = vmatpush1.msra.mxu0 0.0
        %321 = vmatprep.subr.mxu0 0.0
        %322 = vmatpush1.msra.mxu0 0.0
        %323 = vmatprep.subr.mxu0 0.0
        %324 = vmatpush1.msra.mxu0 %v291
        %325 = vmatprep.subr.mxu0 0.0
        %326 = vmatpush2.msra.mxu0 0.0
        %327 = vmatprep.subr.mxu0 0.0
        %328 = vmatpush2.msra.mxu0 0.0
        %329 = vmatprep.subr.mxu0 0.0
        %330 = vmatpush2.msra.mxu0 0.0
        %331 = vmatprep.subr.mxu0 0.0
        %332 = vmatpush2.msra.mxu0 0.0
        %333 = vmatprep.subr.mxu0 0.0
        %334 = vmatpush2.msra.mxu0 0.0
        %335 = vmatprep.subr.mxu0 0.0
        %336 = vmatpush2.msra.mxu0 0.0
        %337 = vmatprep.subr.mxu0 0.0
        %338 = vmatpush2.msra.mxu0 0.0
        %339 = vmatprep.subr.mxu0 0.0
        %340 = vmatpush2.msra.mxu0 0.0
        %341 = vmatprep.subr.mxu0 0.0
        %342 = vmatpush2.msra.mxu0 0.0
        %343 = vmatprep.subr.mxu0 0.0
        %344 = vmatpush2.msra.mxu0 0.0
        %345 = vmatprep.subr.mxu0 0.0
        %346 = vmatpush2.msra.mxu0 0.0
        %347 = vmatprep.subr.mxu0 0.0
        %348 = vmatpush2.msra.mxu0 0.0
        %349 = vmatprep.subr.mxu0 0.0
        %350 = vmatpush2.msra.mxu0 0.0
        %351 = vmatprep.subr.mxu0 0.0
        %352 = vmatpush2.msra.mxu0 0.0
        %353 = vmatprep.subr.mxu0 0.0
        %354 = vmatpush2.msra.mxu0 0.0
        %355 = vmatprep.subr.mxu0 0.0
        %356 = vmatpush2.msra.mxu0 0.0
        %357 = vmatprep.mubr.f32.mxu0 0.0
        %358 = vmatmul.mubr.f32.gmra.mxu0 %v287
        %v359 = vpop.f32.mrf.mxu0
        %v360 = vadd.f32 %v284, %v359
        %v361 = vpop.f32.mrf.mxu0
        %362 = vdwg.mxu0
        %v363 = vxor.u32 %v360, 2147483648
        %v364 = vmul.f32 %v363, 1.442695
        %v365 = vpow.pop %v364
        %v366 = vadd.f32 %v365, 1.0
        %v367 = vrcp.pop %v366
        %v368 = vmul.f32 1.0, %v367
        %v369 = vld [vmem:[%s278] sm:$0xff]
        %v370 = vld [vmem:[%s278 + $0x8] sm:$0xff]
        %v371 = vld [vmem:[%s2] sm:$0xff]
        %v372 = vld [vmem:[%s3] sm:$0x1]
        %v374 = vlaneseq
        %v375 = vshrl.u32 %v374, 7
        %v376 = vsub.s32 0, %v375
        %v377 = vrot.slane %v372, %v376
        %vm379 = vcmask 64512
        %v381 = vsel %vm379, %v369, 0
        %v384 = vsel %vm379, %v370, 0
        %386 = vmatprep.subr.mxu0 0.0
        %387 = vmatpush1.msra.mxu0 0.0
        %388 = vmatprep.subr.mxu0 0.0
        %389 = vmatpush1.msra.mxu0 0.0
        %390 = vmatprep.subr.mxu0 0.0
        %391 = vmatpush1.msra.mxu0 0.0
        %392 = vmatprep.subr.mxu0 0.0
        %393 = vmatpush1.msra.mxu0 0.0
        %394 = vmatprep.subr.mxu0 0.0
        %395 = vmatpush1.msra.mxu0 0.0
        %396 = vmatprep.subr.mxu0 0.0
        %397 = vmatpush1.msra.mxu0 0.0
        %398 = vmatprep.subr.mxu0 0.0
        %399 = vmatpush1.msra.mxu0 0.0
        %400 = vmatprep.subr.mxu0 0.0
        %401 = vmatpush1.msra.mxu0 0.0
        %402 = vmatprep.subr.mxu0 0.0
        %403 = vmatpush1.msra.mxu0 0.0
        %404 = vmatprep.subr.mxu0 0.0
        %405 = vmatpush1.msra.mxu0 0.0
        %406 = vmatprep.subr.mxu0 0.0
        %407 = vmatpush1.msra.mxu0 0.0
        %408 = vmatprep.subr.mxu0 0.0
        %409 = vmatpush1.msra.mxu0 0.0
        %410 = vmatprep.subr.mxu0 0.0
        %411 = vmatpush1.msra.mxu0 0.0
        %412 = vmatprep.subr.mxu0 0.0
        %413 = vmatpush1.msra.mxu0 0.0
        %414 = vmatprep.subr.mxu0 0.0
        %415 = vmatpush1.msra.mxu0 0.0
        %416 = vmatprep.subr.mxu0 0.0
        %417 = vmatpush1.msra.mxu0 %v371
        %418 = vmatprep.subr.mxu0 0.0
        %419 = vmatpush2.msra.mxu0 0.0
        %420 = vmatprep.subr.mxu0 0.0
        %421 = vmatpush2.msra.mxu0 0.0
        %422 = vmatprep.subr.mxu0 0.0
        %423 = vmatpush2.msra.mxu0 0.0
        %424 = vmatprep.subr.mxu0 0.0
        %425 = vmatpush2.msra.mxu0 0.0
        %426 = vmatprep.subr.mxu0 0.0
        %427 = vmatpush2.msra.mxu0 0.0
        %428 = vmatprep.subr.mxu0 0.0
        %429 = vmatpush2.msra.mxu0 0.0
        %430 = vmatprep.subr.mxu0 0.0
        %431 = vmatpush2.msra.mxu0 0.0
        %432 = vmatprep.subr.mxu0 0.0
        %433 = vmatpush2.msra.mxu0 0.0
        %434 = vmatprep.subr.mxu0 0.0
        %435 = vmatpush2.msra.mxu0 0.0
        %436 = vmatprep.subr.mxu0 0.0
        %437 = vmatpush2.msra.mxu0 0.0
        %438 = vmatprep.subr.mxu0 0.0
        %439 = vmatpush2.msra.mxu0 0.0
        %440 = vmatprep.subr.mxu0 0.0
        %441 = vmatpush2.msra.mxu0 0.0
        %442 = vmatprep.subr.mxu0 0.0
        %443 = vmatpush2.msra.mxu0 0.0
        %444 = vmatprep.subr.mxu0 0.0
        %445 = vmatpush2.msra.mxu0 0.0
        %446 = vmatprep.subr.mxu0 0.0
        %447 = vmatpush2.msra.mxu0 0.0
        %448 = vmatprep.subr.mxu0 0.0
        %449 = vmatpush2.msra.mxu0 0.0
        %450 = vmatprep.mubr.f32.mxu0 0.0
        %451 = vmatmul.mubr.f32.gmra.mxu0 %v381
        %v452 = vpop.f32.mrf.mxu0
        %v453 = vadd.f32 %v377, %v452
        %v454 = vpop.f32.mrf.mxu0
        %455 = vmatprep.mubr.f32.mxu0 0.0
        %456 = vmatmul.mubr.f32.gmra.mxu0 %v384
        %v457 = vpop.f32.mrf.mxu0
        %v458 = vadd.f32 %v377, %v457
        %v459 = vpop.f32.mrf.mxu0
        %460 = vdwg.mxu0
        %v461 = vlaneseq
        %v462 = vshrl.u32 %v461, 7
        %v463 = vsub.s32 0, %v462
        %v464 = vrot.slane %v368, %v463
        %v465 = vmul.f32 %v453, %v464
        %v466 = vmul.f32 %v458, %v464
        %v467 = vlaneseq
        %v468 = vshrl.u32 %v467, 7
        %v469 = vsub.s32 0, %v468
        %v470 = vrot.slane %v360, %v469
        %472 = vrot.lane.b32.xlu0 %v470, 96
        %v473 = vpop.permute.xlu0 %472
        %v475 = vadd.f32 %v465, %v473
        %v476 = vadd.f32 %v466, %v473
        %vm477 = vcmask 261120
        %478 = vst.msk [vmem:[%s269] sm:$0xff] %vm477, %v475
        %479 = vst.msk [vmem:[%s269 + $0x8] sm:$0xff] %vm477, %v476
        %s480 = sand.u32 %s175, 1
        %s481 = scalar_lea.sflag [#allocation3], %s480
        %s482 = sand.u32 %s175, 1
        %s483 = smul.addr %s482, 16
        %s484 = scalar_lea.vmem [#allocation2], %s483
        // Predicated region
        $region45: #{tpu_custom_call.1} parent=43 // pred_check
          %p485 = pneg %p185
        $region46: #{tpu_custom_call.1} parent=43 // pred_check_branch
          %487 = sbr.rel (%p485) target = $region48
        $region47: #{tpu_custom_call.1} parent=43 // pred_region
          %s488 = smul.u32 2, %s25
          %s490 = ssub.s32 256, 256
          %491 = vsyncadd %s481, %s490
          %s492 = smul.addr %s24, 2
          %s493 = sadd.s32 %s488, %s492
          %s494 = smul.addr %s493, 128
          %s495 = scalar_lea.hbm %s6, %s494
          %s496 = sshll.u32 %s484, 4
          %s497 = int_to_ptr.vmem [resolvable:$true] %s496
          %502 = dma.vmem_to_hbm [thread:$0]  %s497, 256, %s495, %s481, 128, 128, 8
        $region48: #{tpu_custom_call.1} parent=43 // pred_fallthru
          _
      $region44: #{tpu_custom_call.1} parent=5 // pred_fallthru
        _
      %p503 = scmp.le.s32.totalorder 2, %s15
      // Predicated region
      $region49: #{tpu_custom_call.1} parent=5 // pred_check
        %p504 = pneg %p503
      $region50: #{tpu_custom_call.1} parent=5 // pred_check_branch
        %506 = sbr.rel (%p504) target = $region52
      $region51: #{tpu_custom_call.1} parent=5 // pred_region
        %s507 = ssub.s32 %s15, 2
        // Predicated region
        $region53: #{tpu_custom_call.1} parent=51 // pred_check
          %p508 = pneg %p191
        $region54: #{tpu_custom_call.1} parent=51 // pred_check_branch
          %510 = sbr.rel (%p508) target = $region56
        $region55: #{tpu_custom_call.1} parent=51 // pred_region
          %s511 = sand.u32 %s176, 1
          %s512 = scalar_lea.sflag [#allocation3], %s511
          %s513 = sand.u32 %s176, 1
          %s514 = smul.addr %s513, 16
          %s515 = scalar_lea.vmem [#allocation2], %s514
          %516 = dma.done %s512, 256
        $region56: #{tpu_custom_call.1} parent=51 // pred_fallthru
          _
      $region52: #{tpu_custom_call.1} parent=5 // pred_fallthru
        _
    $region6: #{tpu_custom_call.1} parent=1 // loop_footer
      %s19 = sadd.s32 1, %s15
    $region7: #{tpu_custom_call.1} parent=1 // loop_footer_branch
      %14 = sbr.rel target = $region3
    $region8: #{tpu_custom_call.1} parent=1 // loop_exit
      _
    %517 = vsyncpa [#allocation3], 1
    %s518 = scalar_lea.sflag [#allocation3], 1
    %519 = vsyncpa %s518, 1

</llo_original>
